<compile_context>
chip_gen: v7x
topology: tpu7x:2x2x1
jax: 0.10.0
libtpu: 0.0.40
codegen_flags: <defaults>
</compile_context>

<pallas_src>
import jax
import jax.numpy as jnp
from jax.experimental import pallas as pl
from jax.experimental.pallas import tpu as pltpu


def _plf_kernel(xk_ref, dk_ref, t_ref, o_ref):
    # xk_ref, dk_ref: (M,) f32 in SMEM (breakpoints[:-1] and slope deltas,
    # with dk[0] = s0).  t_ref / o_ref: rank-2 lane-dense VMEM tiles.
    #
    # TODO(synk): on v6e/v7x this is VALU-bound (~4 ops/segment/elem); a bf16
    # relu-term path (f32 accumulator) or an MXU offload of the MAC would cut
    # that, but bf16 terms break the 1e-4 f32 reference tolerance and M=8 is
    # too small for the MXU to pay off, so the f32 VPU path is kept.
    M = xk_ref.shape[0]
    t = t_ref[...].astype(jnp.float32)
    res = dk_ref[0] * (t - xk_ref[0])
    for k in range(1, M):                 # M is small & static -> fully unrolled
        res = res + dk_ref[k] * jnp.maximum(t - xk_ref[k], 0.0)
    o_ref[...] = res.astype(o_ref.dtype)


def _round_up(x, m):
    return ((x + m - 1) // m) * m


def plf_forward(t, breakpoints, theta, s0, eps=1e-4, out_dtype=None):
    # ---- tiny O(M) parameter precompute (plain JAX glue) ----
    deltas = jax.nn.softplus(theta.astype(jnp.float32)) + eps           # (M,)
    xk = breakpoints[:-1].astype(jnp.float32)                           # (M,)
    # dk[0] = s0 (first slope); dk[k] = slopes[k] - slopes[k-1] = deltas[k-1]
    dk = jnp.concatenate(
        [jnp.reshape(s0, (1,)).astype(jnp.float32), deltas[:-1]])       # (M,)

    if out_dtype is None:
        # Matches the PyTorch reference (f32 params promote the result). Pass
        # out_dtype=jnp.bfloat16 explicitly to halve writeback bytes on v5e if
        # the consumer tolerates it.
        out_dtype = jnp.promote_types(t.dtype, jnp.float32)

    orig_shape = t.shape
    flat = t.reshape(-1)                       # bitcast-level reshape, no copy
    n = flat.shape[0]
    C = 128

    # Sublane granularity follows dtype packing: 8 rows (f32), 16 (bf16), 32 (int8).
    itemsize = min(jnp.dtype(flat.dtype).itemsize, jnp.dtype(out_dtype).itemsize)
    sub = {4: 8, 2: 16, 1: 32}[itemsize]

    # >= 2 grid steps restores double-buffered DMA/compute overlap; >= 4 gives
    # both v7x TensorCores at least 2 blocks each.
    TARGET_STEPS = 4
    # 4096x128 f32 = 2 MiB/block; in+out double-buffered = 8 MiB, fits the
    # 16 MiB scoped-VMEM default on v5e and leaves ample headroom on v6e/v7x.
    MAX_TILE_ROWS = 4096

    if n % C == 0:
        # Fast path: copy-free lane-dense (rows, 128) view.
        rows = n // C
        x2d = flat.reshape(rows, C)
        tile_rows = max(sub, min(MAX_TILE_ROWS,
                                 _round_up(pl.cdiv(rows, TARGET_STEPS), sub)))
        block = (tile_rows, C)
        grid = (pl.cdiv(rows, tile_rows),)
        index_map = lambda i: (i, 0)
    else:
        # Ragged fallback: copy-free (1, n) view; the last lane block simply
        # overhangs and Pallas masks the OOB tail, so there is no pad-concat
        # pass over the input and no [:n] slice pass over the output.
        # (Single-sublane layout wastes vreg sublanes, so keep n % 128 == 0
        # upstream when this op is hot.)
        x2d = flat.reshape(1, n)
        MAX_TILE_LANES = 32 * 1024
        tile_lanes = max(C, min(MAX_TILE_LANES,
                                _round_up(pl.cdiv(n, TARGET_STEPS), C)))
        block = (1, tile_lanes)
        grid = (pl.cdiv(n, tile_lanes),)
        index_map = lambda i: (0, i)

    out = pl.pallas_call(
        _plf_kernel,
        out_shape=jax.ShapeDtypeStruct(x2d.shape, out_dtype),
        grid=grid,
        in_specs=[
            pl.BlockSpec(memory_space=pltpu.MemorySpace.SMEM),   # xk (breakpoints)
            pl.BlockSpec(memory_space=pltpu.MemorySpace.SMEM),   # dk (slope deltas)
            pl.BlockSpec(block, index_map),                      # t tile
        ],
        out_specs=pl.BlockSpec(block, index_map),
        # "parallel" lets megacore / dual-TC parts shard the streaming axis.
        # TODO(synk): on v7x, confirm via xprof that both TCs get blocks; if one
        # sits idle, switch this axis to pltpu.CORE_PARALLEL.
        compiler_params=pltpu.CompilerParams(
            dimension_semantics=("parallel",)),
    )(xk, dk, x2d)

    return out.reshape(orig_shape)   # same element count -> copy-free reshape


def _plf_reference(t, breakpoints, theta, s0, eps=1e-4):
    # Pure-JAX mirror of the PyTorch forward (gather-based), for validation.
    M = breakpoints.shape[0] - 1
    deltas = jax.nn.softplus(theta) + eps
    slopes = jnp.cumsum(jnp.concatenate([jnp.reshape(s0, (1,)), deltas]))
    f_xi = jnp.cumsum(jnp.concatenate(
        [jnp.zeros((1,), jnp.float32), slopes[:-1] * jnp.diff(breakpoints)]))
    idx = jnp.clip(jnp.searchsorted(breakpoints, t, side="left") - 1, 0, M - 1)
    return f_xi[idx] + slopes[idx] * (t - breakpoints[idx])


if __name__ == "__main__":
    key = jax.random.PRNGKey(0)
    k_theta, k_t, k_t2 = jax.random.split(key, 3)

    # Deterministic synthetic "parameters".
    breakpoints = jnp.linspace(-2.0, 2.0, 9, dtype=jnp.float32)   # K=9 -> M=8
    M = breakpoints.shape[0] - 1
    theta = 0.1 * jax.random.normal(k_theta, (M,), dtype=jnp.float32)
    s0 = jnp.asarray(0.5, dtype=jnp.float32)
    eps = 1e-4

    # Input t (elementwise); includes values outside the breakpoint range to
    # exercise the linear-extrapolation clamp at both ends.  n = 2048 -> the
    # aligned (rows, 128) path with a 2-step grid.
    t = 3.0 * jax.random.normal(k_t, (2, 4, 16, 16), dtype=jnp.float32)
    out = jax.block_until_ready(plf_forward(t, breakpoints, theta, s0, eps))
    ref = _plf_reference(t, breakpoints, theta, s0, eps)
    assert out.shape == t.shape and out.dtype == jnp.float32
    assert jnp.allclose(out, ref, atol=1e-4, rtol=1e-5), "mismatch vs reference"

    # Ragged shape (n = 105): exercises the copy-free (1, n) fallback with a
    # Pallas-masked partial lane block (no pad / no output slice).
    t2 = 3.0 * jax.random.normal(k_t2, (3, 5, 7), dtype=jnp.float32)
    out2 = jax.block_until_ready(plf_forward(t2, breakpoints, theta, s0, eps))
    ref2 = _plf_reference(t2, breakpoints, theta, s0, eps)
    assert out2.shape == t2.shape
    assert jnp.allclose(out2, ref2, atol=1e-4, rtol=1e-5), "ragged mismatch"

    print("KERNEL_OK")
</pallas_src>

<mosaic_0001>
module attributes {stable_mosaic.version = 11 : i64} {
  func.func @_plf_kernel(%arg0: i32, %arg1: memref<8xf32, #tpu.memory_space<smem>>, %arg2: memref<8xf32, #tpu.memory_space<smem>>, %arg3: memref<8x128xf32, #tpu.memory_space<vmem>>, %arg4: memref<8x128xf32, #tpu.memory_space<vmem>>) attributes {dimension_semantics = [#tpu.dimension_semantics<parallel>], iteration_bounds = array<i64: 2>, scalar_prefetch = 0 : i64, scratch_operands = 0 : i64, tpu.core_type = #tpu.core_type<tc>, window_params = [{transform_indices = @transform_0, window_bounds = array<i64: 8>}, {transform_indices = @transform_1, window_bounds = array<i64: 8>}, {transform_indices = @transform_2, window_bounds = array<i64: 8, 128>}, {transform_indices = @transform_3, window_bounds = array<i64: 8, 128>}]} {
    %c0 = arith.constant 0 : index
    %c0_0 = arith.constant 0 : index
    %0 = vector.load %arg3[%c0, %c0_0] : memref<8x128xf32, #tpu.memory_space<vmem>>, vector<8x128xf32>
    %c0_1 = arith.constant 0 : index
    %1 = memref.load %arg2[%c0_1] : memref<8xf32, #tpu.memory_space<smem>>
    %c0_2 = arith.constant 0 : index
    %2 = memref.load %arg1[%c0_2] : memref<8xf32, #tpu.memory_space<smem>>
    %3 = vector.broadcast %2 : f32 to vector<8x128xf32>
    %4 = arith.subf %0, %3 : vector<8x128xf32>
    %5 = vector.broadcast %1 : f32 to vector<8x128xf32>
    %6 = arith.mulf %5, %4 : vector<8x128xf32>
    %c1 = arith.constant 1 : index
    %7 = memref.load %arg2[%c1] : memref<8xf32, #tpu.memory_space<smem>>
    %c1_3 = arith.constant 1 : index
    %8 = memref.load %arg1[%c1_3] : memref<8xf32, #tpu.memory_space<smem>>
    %9 = vector.broadcast %8 : f32 to vector<8x128xf32>
    %10 = arith.subf %0, %9 : vector<8x128xf32>
    %cst = arith.constant 0.000000e+00 : f32
    %11 = vector.broadcast %cst : f32 to vector<8x128xf32>
    %12 = arith.maximumf %10, %11 : vector<8x128xf32>
    %13 = vector.broadcast %7 : f32 to vector<8x128xf32>
    %14 = arith.mulf %13, %12 : vector<8x128xf32>
    %15 = arith.addf %6, %14 : vector<8x128xf32>
    %c2 = arith.constant 2 : index
    %16 = memref.load %arg2[%c2] : memref<8xf32, #tpu.memory_space<smem>>
    %c2_4 = arith.constant 2 : index
    %17 = memref.load %arg1[%c2_4] : memref<8xf32, #tpu.memory_space<smem>>
    %18 = vector.broadcast %17 : f32 to vector<8x128xf32>
    %19 = arith.subf %0, %18 : vector<8x128xf32>
    %cst_5 = arith.constant 0.000000e+00 : f32
    %20 = vector.broadcast %cst_5 : f32 to vector<8x128xf32>
    %21 = arith.maximumf %19, %20 : vector<8x128xf32>
    %22 = vector.broadcast %16 : f32 to vector<8x128xf32>
    %23 = arith.mulf %22, %21 : vector<8x128xf32>
    %24 = arith.addf %15, %23 : vector<8x128xf32>
    %c3 = arith.constant 3 : index
    %25 = memref.load %arg2[%c3] : memref<8xf32, #tpu.memory_space<smem>>
    %c3_6 = arith.constant 3 : index
    %26 = memref.load %arg1[%c3_6] : memref<8xf32, #tpu.memory_space<smem>>
    %27 = vector.broadcast %26 : f32 to vector<8x128xf32>
    %28 = arith.subf %0, %27 : vector<8x128xf32>
    %cst_7 = arith.constant 0.000000e+00 : f32
    %29 = vector.broadcast %cst_7 : f32 to vector<8x128xf32>
    %30 = arith.maximumf %28, %29 : vector<8x128xf32>
    %31 = vector.broadcast %25 : f32 to vector<8x128xf32>
    %32 = arith.mulf %31, %30 : vector<8x128xf32>
    %33 = arith.addf %24, %32 : vector<8x128xf32>
    %c4 = arith.constant 4 : index
    %34 = memref.load %arg2[%c4] : memref<8xf32, #tpu.memory_space<smem>>
    %c4_8 = arith.constant 4 : index
    %35 = memref.load %arg1[%c4_8] : memref<8xf32, #tpu.memory_space<smem>>
    %36 = vector.broadcast %35 : f32 to vector<8x128xf32>
    %37 = arith.subf %0, %36 : vector<8x128xf32>
    %cst_9 = arith.constant 0.000000e+00 : f32
    %38 = vector.broadcast %cst_9 : f32 to vector<8x128xf32>
    %39 = arith.maximumf %37, %38 : vector<8x128xf32>
    %40 = vector.broadcast %34 : f32 to vector<8x128xf32>
    %41 = arith.mulf %40, %39 : vector<8x128xf32>
    %42 = arith.addf %33, %41 : vector<8x128xf32>
    %c5 = arith.constant 5 : index
    %43 = memref.load %arg2[%c5] : memref<8xf32, #tpu.memory_space<smem>>
    %c5_10 = arith.constant 5 : index
    %44 = memref.load %arg1[%c5_10] : memref<8xf32, #tpu.memory_space<smem>>
    %45 = vector.broadcast %44 : f32 to vector<8x128xf32>
    %46 = arith.subf %0, %45 : vector<8x128xf32>
    %cst_11 = arith.constant 0.000000e+00 : f32
    %47 = vector.broadcast %cst_11 : f32 to vector<8x128xf32>
    %48 = arith.maximumf %46, %47 : vector<8x128xf32>
    %49 = vector.broadcast %43 : f32 to vector<8x128xf32>
    %50 = arith.mulf %49, %48 : vector<8x128xf32>
    %51 = arith.addf %42, %50 : vector<8x128xf32>
    %c6 = arith.constant 6 : index
    %52 = memref.load %arg2[%c6] : memref<8xf32, #tpu.memory_space<smem>>
    %c6_12 = arith.constant 6 : index
    %53 = memref.load %arg1[%c6_12] : memref<8xf32, #tpu.memory_space<smem>>
    %54 = vector.broadcast %53 : f32 to vector<8x128xf32>
    %55 = arith.subf %0, %54 : vector<8x128xf32>
    %cst_13 = arith.constant 0.000000e+00 : f32
    %56 = vector.broadcast %cst_13 : f32 to vector<8x128xf32>
    %57 = arith.maximumf %55, %56 : vector<8x128xf32>
    %58 = vector.broadcast %52 : f32 to vector<8x128xf32>
    %59 = arith.mulf %58, %57 : vector<8x128xf32>
    %60 = arith.addf %51, %59 : vector<8x128xf32>
    %c7 = arith.constant 7 : index
    %61 = memref.load %arg2[%c7] : memref<8xf32, #tpu.memory_space<smem>>
    %c7_14 = arith.constant 7 : index
    %62 = memref.load %arg1[%c7_14] : memref<8xf32, #tpu.memory_space<smem>>
    %63 = vector.broadcast %62 : f32 to vector<8x128xf32>
    %64 = arith.subf %0, %63 : vector<8x128xf32>
    %cst_15 = arith.constant 0.000000e+00 : f32
    %65 = vector.broadcast %cst_15 : f32 to vector<8x128xf32>
    %66 = arith.maximumf %64, %65 : vector<8x128xf32>
    %67 = vector.broadcast %61 : f32 to vector<8x128xf32>
    %68 = arith.mulf %67, %66 : vector<8x128xf32>
    %69 = arith.addf %60, %68 : vector<8x128xf32>
    %c0_16 = arith.constant 0 : index
    %c0_17 = arith.constant 0 : index
    %70 = vector.load %arg4[%c0_16, %c0_17] : memref<8x128xf32, #tpu.memory_space<vmem>>, vector<8x128xf32>
    tpu.vector_store %arg4[%c0_16, %c0_17], %69 {strides = array<i32>} : memref<8x128xf32, #tpu.memory_space<vmem>>, vector<8x128xf32>,
    return
  }
  func.func @transform_0(%arg0: i32) -> i32 {
    %c0_i32 = arith.constant 0 : i32
    %c0_i32_0 = arith.constant 0 : i32
    return %c0_i32 : i32
  }
  func.func @transform_1(%arg0: i32) -> i32 {
    %c0_i32 = arith.constant 0 : i32
    %c0_i32_0 = arith.constant 0 : i32
    return %c0_i32 : i32
  }
  func.func @transform_2(%arg0: i32) -> (i32, i32) {
    %c0_i32 = arith.constant 0 : i32
    %c0_i32_0 = arith.constant 0 : i32
    return %arg0, %c0_i32 : i32, i32
  }
  func.func @transform_3(%arg0: i32) -> (i32, i32) {
    %c0_i32 = arith.constant 0 : i32
    %c0_i32_0 = arith.constant 0 : i32
    return %arg0, %c0_i32 : i32, i32
  }
}

</mosaic_0001>

<llo_original>
// kernel: tpu_custom_call.1
$region0: #{tpu_custom_call.1}
  #allocation0 [shape = 'u32[]', space=smem, size = 0x4, offset = 0x4, fixed_abs, tag = 'smem constant byte address 0x4 - core index']
  #allocation1 [shape = 'u32[144,128]{1,0:T(1,128)}', space=vmem, size = 0x12000, scoped, tag = 'internal scratch']
  %s0 = inlined_call_operand.hbm [shape: f32[8], index: 0, kind: input, shape index: {}]
  %s1 = inlined_call_operand.vmem [shape: f32[8], index: 1, kind: input, shape index: {}]
  %s2 = inlined_call_operand.hbm [shape: f32[16,128], index: 2, kind: input, shape index: {}]
  %s3 = inlined_call_operand.hbm [shape: f32[16,128], index: 3, kind: output, shape index: {}]
  %s4 = sld [smem:[#allocation0]]
  $region57: #{tpu_custom_call.1} parent=0
    _
  %s6 = ssub.s32 1, %s4
  %s7 = scalar_select 0, %s6, %s4
  $region1: #{tpu_custom_call.1} parent=0
    #allocation2 [shape = 'u8[512]{0}', space=smem, size = 0x200, scoped, tag = 'input window, operand 0, single buffered']
    #allocation3 [shape = 's32[2]{0}', space=sflag, size = 0x8, scoped, tag = 'scoped memory for tpu_custom_call.1']
    #allocation4 [shape = 's32[2]{0}', space=sflag, size = 0x8, scoped, tag = 'scoped memory for tpu_custom_call.1']
    #allocation5 [shape = 's32[2]{0}', space=sflag, size = 0x8, scoped, tag = 'scoped memory for tpu_custom_call.1']
    #allocation6 [shape = 's32[2]{0}', space=sflag, size = 0x8, scoped, tag = 'scoped memory for tpu_custom_call.1']
    #allocation7 [shape = 'u8[512]{0}', space=smem, size = 0x200, scoped, tag = 'input window, operand 1, single buffered']
    #allocation8 [shape = 'u8[8192]{0}', space=vmem, size = 0x2000, scoped, tag = 'input window, operand 2']
    #allocation9 [shape = 'u8[8192]{0}', space=vmem, size = 0x2000, scoped, tag = 'output window, operand 0']
    %8 = vsyncpa [#allocation5], 0
    %9 = vsyncpa [#allocation6], 0
    %10 = vsyncpa [#allocation3], 0
    %s11 = scalar_lea.sflag [#allocation3], 1
    %12 = vsyncpa %s11, 0
    %13 = vsyncpa [#allocation4], 0
    %s14 = scalar_lea.sflag [#allocation4], 1
    %15 = vsyncpa %s14, 0
    loop: start=0, step=1, limit=4
    $region2: #{tpu_custom_call.1} parent=1 // loop_pre_header
      _
    $region3: #{tpu_custom_call.1} parent=1 // loop_header
      %s17 = sphi 0, %s21
      %p18 = scmp.ge.s32.totalorder %s17, 4
      %s25 = sphi 0, %s25
      %s27 = sphi 0, %s25
      %s28 = sphi 0, %s27
      %s42 = sphi 0, %s28
      %s46 = sphi 0, %s46
      %s48 = sphi 0, %s46
      %s49 = sphi 0, %s48
      %s63 = sphi 0, %s49
      %s69 = sphi 0, %s71
      %s72 = sphi 0, %s69
      %s73 = sphi 0, %s72
      %s89 = sphi 0, %s73
      %s95 = sphi 0, %s97
      %s98 = sphi 0, %s95
      %s99 = sphi 0, %s98
      %s115 = sphi 0, %s99
    $region4: #{tpu_custom_call.1} parent=1 // loop_header_branch
      %20 = sbr.rel (%p18) target = $region8
    $region5: #{tpu_custom_call.1} parent=1 // loop_body
      %s22 = ssub.s32 %s17, 1
      %s23 = ssub.s32 %s17, 2
      %s24 = sadd.s32 %s17, 1
      %s26 = sadd.s32 %s25, 1
      %p29 = scmp.eq.s32.totalorder %s17, 1
      %p30 = scmp.ne.s32.totalorder %s25, %s27
      %p31 = scmp.eq.s32.totalorder %s17, 0
      %p32 = por %p30, %p31
      %p33 = scmp.ne.s32.totalorder %s25, %s27
      %p34 = scmp.eq.s32.totalorder %s22, 1
      %p35 = por %p33, %p34
      %p36 = scmp.ne.s32.totalorder %s27, %s28
      %p37 = scmp.eq.s32.totalorder %s22, 0
      %p38 = por %p36, %p37
      %p39 = scmp.ne.s32.totalorder %s27, %s28
      %p40 = scmp.eq.s32.totalorder %s23, 1
      %p41 = por %p39, %p40
      %p43 = scmp.ne.s32.totalorder %s28, %s42
      %p44 = scmp.eq.s32.totalorder %s23, 0
      %p45 = por %p43, %p44
      %s47 = sadd.s32 %s46, 1
      %p50 = scmp.eq.s32.totalorder %s17, 1
      %p51 = scmp.ne.s32.totalorder %s46, %s48
      %p52 = scmp.eq.s32.totalorder %s17, 0
      %p53 = por %p51, %p52
      %p54 = scmp.ne.s32.totalorder %s46, %s48
      %p55 = scmp.eq.s32.totalorder %s22, 1
      %p56 = por %p54, %p55
      %p57 = scmp.ne.s32.totalorder %s48, %s49
      %p58 = scmp.eq.s32.totalorder %s22, 0
      %p59 = por %p57, %p58
      %p60 = scmp.ne.s32.totalorder %s48, %s49
      %p61 = scmp.eq.s32.totalorder %s23, 1
      %p62 = por %p60, %p61
      %p64 = scmp.ne.s32.totalorder %s49, %s63
      %p65 = scmp.eq.s32.totalorder %s23, 0
      %p66 = por %p64, %p65
      %s67 = ssub.s32 %s17, %s24
      %p68 = scmp.eq.s32.totalorder %s67, 0
      %s70 = sadd.s32 %s69, 1
      %s71 = scalar_select %p68, %s69, %s70
      %p74 = pneg %p68
      %p75 = scmp.eq.s32.totalorder %s17, 1
      %p76 = por %p74, %p75
      %p77 = scmp.ne.s32.totalorder %s69, %s72
      %p78 = scmp.eq.s32.totalorder %s17, 0
      %p79 = por %p77, %p78
      %p80 = scmp.ne.s32.totalorder %s69, %s72
      %p81 = scmp.eq.s32.totalorder %s22, 1
      %p82 = por %p80, %p81
      %p83 = scmp.ne.s32.totalorder %s72, %s73
      %p84 = scmp.eq.s32.totalorder %s22, 0
      %p85 = por %p83, %p84
      %p86 = scmp.ne.s32.totalorder %s72, %s73
      %p87 = scmp.eq.s32.totalorder %s23, 1
      %p88 = por %p86, %p87
      %p90 = scmp.ne.s32.totalorder %s73, %s89
      %p91 = scmp.eq.s32.totalorder %s23, 0
      %p92 = por %p90, %p91
      %s93 = ssub.s32 %s17, %s24
      %p94 = scmp.eq.s32.totalorder %s93, 0
      %s96 = sadd.s32 %s95, 1
      %s97 = scalar_select %p94, %s95, %s96
      %p100 = pneg %p94
      %p101 = scmp.eq.s32.totalorder %s17, 1
      %p102 = por %p100, %p101
      %p103 = scmp.ne.s32.totalorder %s95, %s98
      %p104 = scmp.eq.s32.totalorder %s17, 0
      %p105 = por %p103, %p104
      %p106 = scmp.ne.s32.totalorder %s95, %s98
      %p107 = scmp.eq.s32.totalorder %s22, 1
      %p108 = por %p106, %p107
      %p109 = scmp.ne.s32.totalorder %s98, %s99
      %p110 = scmp.eq.s32.totalorder %s22, 0
      %p111 = por %p109, %p110
      %p112 = scmp.ne.s32.totalorder %s98, %s99
      %p113 = scmp.eq.s32.totalorder %s23, 1
      %p114 = por %p112, %p113
      %p116 = scmp.ne.s32.totalorder %s99, %s115
      %p117 = scmp.eq.s32.totalorder %s23, 0
      %p118 = por %p116, %p117
      %p119 = scmp.le.s32.totalorder 1, %s17
      %p120 = scmp.lt.s32.totalorder %s17, 3
      %p121 = pnand %p119, %p120
      %p122 = pneg %p121
      // Predicated region
      $region9: #{tpu_custom_call.1} parent=5 // pred_check
        _
      $region10: #{tpu_custom_call.1} parent=5 // pred_check_branch
        %124 = sbr.rel (%p121) target = $region12
      $region11: #{tpu_custom_call.1} parent=5 // pred_region
        %s125 = ssub.s32 %s17, 1
        // Predicated region
        $region13: #{tpu_custom_call.1} parent=11 // pred_check
          %p126 = pneg %p38
        $region14: #{tpu_custom_call.1} parent=11 // pred_check_branch
          %128 = sbr.rel (%p126) target = $region16
        $region15: #{tpu_custom_call.1} parent=11 // pred_region
          %s130 = ssub.s32 16, 16
          %131 = vsyncadd [#allocation5], %s130
          %134 = dma.hbm_to_smem %s0, 16, [#allocation2], [#allocation5]
        $region16: #{tpu_custom_call.1} parent=11 // pred_fallthru
          _
        // Predicated region
        $region17: #{tpu_custom_call.1} parent=11 // pred_check
          %p135 = pneg %p59
        $region18: #{tpu_custom_call.1} parent=11 // pred_check_branch
          %137 = sbr.rel (%p135) target = $region20
        $region19: #{tpu_custom_call.1} parent=11 // pred_region
          %s139 = ssub.s32 16, 16
          %140 = vsyncadd [#allocation6], %s139
          %s142 = sshll.u32 %s1, 4
          %s143 = int_to_ptr.vmem [resolvable:$true] %s142
          %145 = dma.vmem_to_smem %s143, 16, [#allocation7], [#allocation6]
        $region20: #{tpu_custom_call.1} parent=11 // pred_fallthru
          _
      $region12: #{tpu_custom_call.1} parent=5 // pred_fallthru
        _
      %p146 = scmp.lt.s32.totalorder %s17, 2
      // Predicated region
      $region21: #{tpu_custom_call.1} parent=5 // pred_check
        %p147 = pneg %p146
      $region22: #{tpu_custom_call.1} parent=5 // pred_check_branch
        %149 = sbr.rel (%p147) target = $region24
      $region23: #{tpu_custom_call.1} parent=5 // pred_region
        // Predicated region
        $region25: #{tpu_custom_call.1} parent=23 // pred_check
          %p150 = pneg %p79
        $region26: #{tpu_custom_call.1} parent=23 // pred_check_branch
          %152 = sbr.rel (%p150) target = $region28
        $region27: #{tpu_custom_call.1} parent=23 // pred_region
          %s153 = sand.u32 %s69, 1
          %s154 = scalar_lea.sflag [#allocation3], %s153
          %s155 = sand.u32 %s69, 1
          %s156 = smul.addr %s155, 8
          %s157 = scalar_lea.vmem [#allocation8], %s156
          %s159 = ssub.s32 128, 128
          %160 = vsyncadd %s154, %s159
          %s161 = smul.addr %s17, 128
          %s162 = scalar_lea.hbm %s2, %s161
          %s164 = sshll.u32 %s157, 4
          %s165 = int_to_ptr.vmem [resolvable:$true] %s164
          %167 = dma.hbm_to_vmem [thread:$0]  %s162, 128, %s165, %s154
        $region28: #{tpu_custom_call.1} parent=23 // pred_fallthru
          _
      $region24: #{tpu_custom_call.1} parent=5 // pred_fallthru
        _
      %p168 = scmp.le.s32.totalorder 1, %s17
      %p169 = scmp.lt.s32.totalorder %s17, 3
      %p170 = pnand %p168, %p169
      %p171 = pneg %p170
      // Predicated region
      $region29: #{tpu_custom_call.1} parent=5 // pred_check
        _
      $region30: #{tpu_custom_call.1} parent=5 // pred_check_branch
        %173 = sbr.rel (%p170) target = $region32
      $region31: #{tpu_custom_call.1} parent=5 // pred_region
        %s174 = ssub.s32 %s17, 1
        // Predicated region
        $region33: #{tpu_custom_call.1} parent=31 // pred_check
          %p175 = pneg %p38
        $region34: #{tpu_custom_call.1} parent=31 // pred_check_branch
          %177 = sbr.rel (%p175) target = $region36
        $region35: #{tpu_custom_call.1} parent=31 // pred_region
          %178 = dma.done [#allocation5], 16
        $region36: #{tpu_custom_call.1} parent=31 // pred_fallthru
          _
        // Predicated region
        $region37: #{tpu_custom_call.1} parent=31 // pred_check
          %p179 = pneg %p59
        $region38: #{tpu_custom_call.1} parent=31 // pred_check_branch
          %181 = sbr.rel (%p179) target = $region40
        $region39: #{tpu_custom_call.1} parent=31 // pred_region
          %182 = dma.done [#allocation6], 16
        $region40: #{tpu_custom_call.1} parent=31 // pred_fallthru
          _
        %s183 = sand.u32 %s72, 1
        %s184 = scalar_lea.sflag [#allocation3], %s183
        %s185 = sand.u32 %s72, 1
        %s186 = smul.addr %s185, 8
        %s187 = scalar_lea.vmem [#allocation8], %s186
        // Predicated region
        $region41: #{tpu_custom_call.1} parent=31 // pred_check
          %p188 = pneg %p85
        $region42: #{tpu_custom_call.1} parent=31 // pred_check_branch
          %190 = sbr.rel (%p188) target = $region44
        $region43: #{tpu_custom_call.1} parent=31 // pred_region
          %191 = dma.done %s184, 128
        $region44: #{tpu_custom_call.1} parent=31 // pred_fallthru
          _
        %192 = sfence
        %p193 = pneg %p38
        %p194 = pneg %p35
        %p195 = pneg %p59
        %p196 = pneg %p56
        %s197 = sand.u32 %s72, 1
        %s198 = scalar_lea.sflag [#allocation3], %s197
        %s199 = sand.u32 %s72, 1
        %s200 = smul.addr %s199, 8
        %s201 = scalar_lea.vmem [#allocation8], %s200
        %p202 = pneg %p85
        %p203 = pneg %p82
        %p204 = pneg %p111
        %p205 = pneg %p108
        %s206 = sand.u32 %s98, 1
        %s207 = scalar_lea.sflag [#allocation4], %s206
        %s208 = sand.u32 %s98, 1
        %s209 = smul.addr %s208, 8
        %s210 = scalar_lea.vmem [#allocation9], %s209
        %v211 = vld [vmem:[%s187] sm:$0xff]
        %s212 = sld [smem:[#allocation7]]
        %s213 = sld [smem:[#allocation2]]
        %v214 = vstv %s213
        %v215 = vsub.f32 %v211, %v214
        %v216 = vstv %s212
        %v217 = vmul.f32 %v216, %v215
        %s218 = sld [smem:[#allocation7 + $0x1]]
        %s219 = sld [smem:[#allocation2 + $0x1]]
        %v220 = vstv %s219
        %v221 = vsub.f32 %v211, %v220
        %v222 = vmax.f32 %v221, 0.0
        %v223 = vstv %s218
        %v224 = vmul.f32 %v223, %v222
        %v225 = vadd.f32 %v217, %v224
        %s226 = sld [smem:[#allocation7 + $0x2]]
        %s227 = sld [smem:[#allocation2 + $0x2]]
        %v228 = vstv %s227
        %v229 = vsub.f32 %v211, %v228
        %v230 = vmax.f32 %v229, 0.0
        %v231 = vstv %s226
        %v232 = vmul.f32 %v231, %v230
        %v233 = vadd.f32 %v225, %v232
        %s234 = sld [smem:[#allocation7 + $0x3]]
        %s235 = sld [smem:[#allocation2 + $0x3]]
        %v236 = vstv %s235
        %v237 = vsub.f32 %v211, %v236
        %v238 = vmax.f32 %v237, 0.0
        %v239 = vstv %s234
        %v240 = vmul.f32 %v239, %v238
        %v241 = vadd.f32 %v233, %v240
        %s242 = sld [smem:[#allocation7 + $0x4]]
        %s243 = sld [smem:[#allocation2 + $0x4]]
        %v244 = vstv %s243
        %v245 = vsub.f32 %v211, %v244
        %v246 = vmax.f32 %v245, 0.0
        %v247 = vstv %s242
        %v248 = vmul.f32 %v247, %v246
        %v249 = vadd.f32 %v241, %v248
        %s250 = sld [smem:[#allocation7 + $0x5]]
        %s251 = sld [smem:[#allocation2 + $0x5]]
        %v252 = vstv %s251
        %v253 = vsub.f32 %v211, %v252
        %v254 = vmax.f32 %v253, 0.0
        %v255 = vstv %s250
        %v256 = vmul.f32 %v255, %v254
        %v257 = vadd.f32 %v249, %v256
        %s258 = sld [smem:[#allocation7 + $0x6]]
        %s259 = sld [smem:[#allocation2 + $0x6]]
        %v260 = vstv %s259
        %v261 = vsub.f32 %v211, %v260
        %v262 = vmax.f32 %v261, 0.0
        %v263 = vstv %s258
        %v264 = vmul.f32 %v263, %v262
        %v265 = vadd.f32 %v257, %v264
        %s266 = sld [smem:[#allocation7 + $0x7]]
        %s267 = sld [smem:[#allocation2 + $0x7]]
        %v268 = vstv %s267
        %v269 = vsub.f32 %v211, %v268
        %v270 = vmax.f32 %v269, 0.0
        %v271 = vstv %s266
        %v272 = vmul.f32 %v271, %v270
        %v273 = vadd.f32 %v265, %v272
        %274 = vst [vmem:[%s210] sm:$0xff] %v273
        %s275 = sand.u32 %s98, 1
        %s276 = scalar_lea.sflag [#allocation4], %s275
        %s277 = sand.u32 %s98, 1
        %s278 = smul.addr %s277, 8
        %s279 = scalar_lea.vmem [#allocation9], %s278
        // Predicated region
        $region45: #{tpu_custom_call.1} parent=31 // pred_check
          %p280 = pneg %p108
        $region46: #{tpu_custom_call.1} parent=31 // pred_check_branch
          %282 = sbr.rel (%p280) target = $region48
        $region47: #{tpu_custom_call.1} parent=31 // pred_region
          %s284 = ssub.s32 128, 128
          %285 = vsyncadd %s276, %s284
          %s286 = smul.addr %s22, 128
          %s287 = scalar_lea.hbm %s3, %s286
          %s289 = sshll.u32 %s279, 4
          %s290 = int_to_ptr.vmem [resolvable:$true] %s289
          %292 = dma.vmem_to_hbm [thread:$0]  %s290, 128, %s287, %s276
        $region48: #{tpu_custom_call.1} parent=31 // pred_fallthru
          _
      $region32: #{tpu_custom_call.1} parent=5 // pred_fallthru
        _
      %p293 = scmp.le.s32.totalorder 2, %s17
      // Predicated region
      $region49: #{tpu_custom_call.1} parent=5 // pred_check
        %p294 = pneg %p293
      $region50: #{tpu_custom_call.1} parent=5 // pred_check_branch
        %296 = sbr.rel (%p294) target = $region52
      $region51: #{tpu_custom_call.1} parent=5 // pred_region
        %s297 = ssub.s32 %s17, 2
        // Predicated region
        $region53: #{tpu_custom_call.1} parent=51 // pred_check
          %p298 = pneg %p114
        $region54: #{tpu_custom_call.1} parent=51 // pred_check_branch
          %300 = sbr.rel (%p298) target = $region56
        $region55: #{tpu_custom_call.1} parent=51 // pred_region
          %s301 = sand.u32 %s99, 1
          %s302 = scalar_lea.sflag [#allocation4], %s301
          %s303 = sand.u32 %s99, 1
          %s304 = smul.addr %s303, 8
          %s305 = scalar_lea.vmem [#allocation9], %s304
          %306 = dma.done %s302, 128
        $region56: #{tpu_custom_call.1} parent=51 // pred_fallthru
          _
      $region52: #{tpu_custom_call.1} parent=5 // pred_fallthru
        _
    $region6: #{tpu_custom_call.1} parent=1 // loop_footer
      %s21 = sadd.s32 1, %s17
    $region7: #{tpu_custom_call.1} parent=1 // loop_footer_branch
      %16 = sbr.rel target = $region3
    $region8: #{tpu_custom_call.1} parent=1 // loop_exit
      _
    %307 = vsyncpa [#allocation3], 1
    %s308 = scalar_lea.sflag [#allocation3], 1
    %309 = vsyncpa %s308, 1
    %310 = vsyncpa [#allocation4], 1
    %s311 = scalar_lea.sflag [#allocation4], 1
    %312 = vsyncpa %s311, 1
    %313 = vsyncpa [#allocation5], 1
    %s314 = scalar_lea.sflag [#allocation5], 1
    %315 = vsyncpa %s314, 1
    %316 = vsyncpa [#allocation6], 1
    %s317 = scalar_lea.sflag [#allocation6], 1
    %318 = vsyncpa %s317, 1

</llo_original>
